<compile_context>
chip_gen: v6e
topology: v6e:2x2x1
jax: 0.10.0
libtpu: 0.0.40
codegen_flags: <defaults>
</compile_context>

<pallas_src>
import functools

import jax
import jax.numpy as jnp
from jax.experimental import pallas as pl
from jax.experimental.pallas import tpu as pltpu

Q1 = 0.1
Q9 = 1.0 - Q1

_LANES = 128
_SUBLANES = 8
_TARGET_TILE_BYTES = 4 << 20      # ~4 MiB per input per grid step
_MAX_STRIP_ROWS = 1024            # bounds the materialized per-strip temp


def _round_up(x, m):
    return ((x + m - 1) // m) * m


def _num_tensorcores():
    """2 on v7x (2 TensorCores / chip), 1 on v5e / v6e.  Defaults to 1."""
    try:
        kind = jax.devices()[0].device_kind.lower()
    except Exception:  # defensive: unknown backend -> safe single-core grid
        return 1
    # TODO(synk): verify on v7x that the "parallel" grid axis really lands on
    # both TensorCores (trace/bundle check); if not, switch the first axis to
    # pltpu.CORE_PARALLEL or an explicit pl.core_map split.
    if "v7" in kind or "7x" in kind:
        return 2
    return 1


def _pinball_elem(o, t, v):
    q_10 = t - (o - v)
    q_90 = t - (o + v)
    return (jnp.maximum(Q1 * q_10, (Q1 - 1.0) * q_10)
            + jnp.maximum(Q9 * q_90, (Q9 - 1.0) * q_90))


def _pinball_kernel(total_rows, steps_per_core, strip_rows, n_strips, two_d,
                    pred_ref, tgt_ref, var_ref, acc_ref):
    block_rows = pred_ref.shape[0]

    if two_d:                          # (core, step) grid   -- v7x only
        c = pl.program_id(0)
        i = pl.program_id(1)
        blk = c * steps_per_core + i
        first_step = i == 0
    else:                              # (step,) grid        -- v5e / v6e
        blk = pl.program_id(0)
        first_step = blk == 0

    @pl.when(first_step)
    def _init():
        acc_ref[...] = jnp.zeros_like(acc_ref)

    block_row0 = blk * block_rows
    # Hoisted once per step: sublane (row-within-strip) iota.
    row_iota = jax.lax.broadcasted_iota(jnp.int32, (strip_rows, _LANES), 0)

    def strip_body(s, acc):
        r0 = pl.multiple_of(s * strip_rows, strip_rows)
        o = pred_ref[pl.ds(r0, strip_rows), :].astype(jnp.float32)
        t = tgt_ref[pl.ds(r0, strip_rows), :].astype(jnp.float32)
        v = var_ref[pl.ds(r0, strip_rows), :].astype(jnp.float32)
        loss = _pinball_elem(o, t, v)
        # Zero rows past the true end of the flattened input: covers the
        # partial last block and fully out-of-range (clamped-DMA) steps.
        row = block_row0 + s * strip_rows + row_iota
        loss = jnp.where(row < total_rows, loss, 0.0)
        # (8, 128) sublane/lane partial sums; the scalar reduce happens once
        # in the wrapper, keeping the hot loop pure vector adds.
        return acc + loss.reshape(strip_rows // _SUBLANES, _SUBLANES,
                                  _LANES).sum(axis=0)

    partial = jax.lax.fori_loop(
        0, n_strips, strip_body,
        jnp.zeros((_SUBLANES, _LANES), jnp.float32), unroll=True)
    acc_ref[...] += partial


def _pinball_main_sum(o1d, t1d, v1d):
    """Sum of pinball losses over a flat, 128-divisible slab via Pallas."""
    n = o1d.shape[0]
    rows = n // _LANES
    o2d = o1d.reshape(rows, _LANES)
    t2d = t1d.reshape(rows, _LANES)
    v2d = v1d.reshape(rows, _LANES)

    itemsize = jnp.dtype(o1d.dtype).itemsize
    sub_mult = {4: 8, 2: 16, 1: 32}.get(itemsize, _SUBLANES)

    max_block_rows = max(sub_mult, _TARGET_TILE_BYTES // (_LANES * itemsize))
    block_rows = min(max_block_rows, _round_up(rows, sub_mult))

    # Largest strip (multiple of the sublane tile) that divides the block.
    strip_rows = block_rows
    for cand in (1024, 512, 256, 128, 64, 32, 16, 8):
        if sub_mult <= cand <= _MAX_STRIP_ROWS and block_rows % cand == 0:
            strip_rows = cand
            break
    n_strips = block_rows // strip_rows

    num_blocks = pl.cdiv(rows, block_rows)
    ncores = min(_num_tensorcores(), num_blocks)

    if ncores > 1:                                   # v7x: 2-TC row-block split
        steps_per_core = pl.cdiv(num_blocks, ncores)
        grid = (ncores, steps_per_core)
        # Clamp so every DMA stays in bounds; out-of-range steps are fully
        # masked inside the kernel (no double counting).
        in_spec = pl.BlockSpec(
            (block_rows, _LANES),
            lambda c, i: (jnp.minimum(c * steps_per_core + i, num_blocks - 1), 0))
        out_spec = pl.BlockSpec((_SUBLANES, _LANES), lambda c, i: (c, 0))
        dim_sem = ("parallel", "arbitrary")
        two_d = True
    else:                                            # v5e / v6e: plain 1-D grid
        steps_per_core = num_blocks
        grid = (num_blocks,)
        in_spec = pl.BlockSpec((block_rows, _LANES), lambda i: (i, 0))
        out_spec = pl.BlockSpec((_SUBLANES, _LANES), lambda i: (0, 0))
        dim_sem = ("arbitrary",)
        two_d = False

    tile_bytes = block_rows * _LANES * itemsize
    # 3 inputs x 2 pipeline buffers x tile + headroom for per-strip temps.
    vmem_limit = int(min(48 << 20, max(32 << 20, 6 * tile_bytes + (8 << 20))))

    cost = pl.CostEstimate(
        flops=11 * n,
        transcendentals=0,
        bytes_accessed=3 * n * itemsize + ncores * _SUBLANES * _LANES * 4)

    partials = pl.pallas_call(
        functools.partial(_pinball_kernel, rows, steps_per_core, strip_rows,
                          n_strips, two_d),
        out_shape=jax.ShapeDtypeStruct((ncores * _SUBLANES, _LANES),
                                       jnp.float32),
        grid_spec=pltpu.PrefetchScalarGridSpec(
            num_scalar_prefetch=0,
            grid=grid,
            in_specs=[in_spec, in_spec, in_spec],
            out_specs=out_spec,
        ),
        compiler_params=pltpu.CompilerParams(
            dimension_semantics=dim_sem,
            vmem_limit_bytes=vmem_limit),
        cost_estimate=cost,
    )(o2d, t2d, v2d)

    return jnp.sum(partials)


def _pinball_tail_sum(o, t, v):
    """Plain-jnp sum of pinball losses for the (<128-element) tail."""
    return jnp.sum(_pinball_elem(o.astype(jnp.float32),
                                 t.astype(jnp.float32),
                                 v.astype(jnp.float32)))


def pinball_loss(output_o, target_o, var_o):
    """Pallas implementation of PinBallLoss.forward. Returns a scalar f32."""
    assert output_o.shape == target_o.shape == var_o.shape
    n_elems = output_o.size
    if n_elems == 0:
        return jnp.float32(0.0)

    of = output_o.reshape(-1)
    tf = target_o.reshape(-1)
    vf = var_o.reshape(-1)

    n_main = (n_elems // _LANES) * _LANES

    total = jnp.float32(0.0)
    if n_main:
        if n_main == n_elems:        # common case: pure reshape, zero copies
            total = total + _pinball_main_sum(of, tf, vf)
        else:
            total = total + _pinball_main_sum(of[:n_main], tf[:n_main],
                                              vf[:n_main])
    if n_main != n_elems:            # <128-element remainder, plain jnp
        total = total + _pinball_tail_sum(of[n_main:], tf[n_main:],
                                          vf[n_main:])

    # sum(loss_10)/N + sum(loss_90)/N == sum(loss_10 + loss_90)/N
    return total / n_elems


def _reference(output_o, target_o, var_o):
    q_10 = target_o - (output_o - var_o)
    q_90 = target_o - (output_o + var_o)
    loss_10 = jnp.maximum(Q1 * q_10, (Q1 - 1.0) * q_10)
    loss_90 = jnp.maximum(Q9 * q_90, (Q9 - 1.0) * q_90)
    return jnp.mean(loss_10) + jnp.mean(loss_90)


if __name__ == "__main__":
    key = jax.random.PRNGKey(0)

    def _check(shape, idx):
        k1, k2, k3 = jax.random.split(jax.random.fold_in(key, idx), 3)
        o = jax.random.normal(k1, shape, dtype=jnp.float32)
        t = jax.random.normal(k2, shape, dtype=jnp.float32)
        v = jnp.abs(jax.random.normal(k3, shape, dtype=jnp.float32))
        got = pinball_loss(o, t, v)
        jax.block_until_ready(got)
        ref = _reference(o, t, v)
        assert jnp.allclose(got, ref, rtol=1e-5, atol=1e-6), (shape, got, ref)

    # NCHW-style prediction / target / variance maps (128-divisible size).
    _check((2, 4, 16, 16), 0)
    # Size not divisible by 128: main Pallas slab + plain-jnp tail path.
    _check((8, 131), 1)
    # Tiny (<128 elements): tail-only path.
    _check((3, 5, 7), 2)

    print("KERNEL_OK")
</pallas_src>

<mosaic_0001>
module attributes {stable_mosaic.version = 11 : i64} {
  func.func @_pinball_kernel(%arg0: i32, %arg1: memref<16x128xf32, #tpu.memory_space<vmem>>, %arg2: memref<16x128xf32, #tpu.memory_space<vmem>>, %arg3: memref<16x128xf32, #tpu.memory_space<vmem>>, %arg4: memref<8x128xf32, #tpu.memory_space<vmem>>) attributes {dimension_semantics = [#tpu.dimension_semantics<arbitrary>], iteration_bounds = array<i64: 1>, scalar_prefetch = 0 : i64, scratch_operands = 0 : i64, tpu.core_type = #tpu.core_type<tc>, window_params = [{transform_indices = @transform_0, window_bounds = array<i64: 16, 128>}, {transform_indices = @transform_1, window_bounds = array<i64: 16, 128>}, {transform_indices = @transform_2, window_bounds = array<i64: 16, 128>}, {pipeline_mode = #tpu.pipeline_mode<synchronous>, transform_indices = @transform_3, window_bounds = array<i64: 8, 128>}]} {
    %c0_i32 = arith.constant 0 : i32
    %0 = arith.cmpi eq, %arg0, %c0_i32 : i32
    %1 = arith.extui %0 : i1 to i32
    %c0_i32_0 = arith.constant 0 : i32
    %2 = arith.cmpi ne, %1, %c0_i32_0 : i32
    scf.if %2 {
      %cst_17 = arith.constant 0.000000e+00 : f32
      %43 = vector.broadcast %cst_17 : f32 to vector<8x128xf32>
      %c0_18 = arith.constant 0 : index
      %c0_19 = arith.constant 0 : index
      %44 = vector.load %arg4[%c0_18, %c0_19] : memref<8x128xf32, #tpu.memory_space<vmem>>, vector<8x128xf32>
      tpu.vector_store %arg4[%c0_18, %c0_19], %43 {strides = array<i32>} : memref<8x128xf32, #tpu.memory_space<vmem>>, vector<8x128xf32>,
    } else {
    }
    %c16_i32 = arith.constant 16 : i32
    %3 = arith.muli %arg0, %c16_i32 : i32
    %4 = tpu.iota {dimensions = array<i32: 0>} : vector<16x128xi32>
    %cst = arith.constant 0.000000e+00 : f32
    %5 = vector.broadcast %cst : f32 to vector<8x128xf32>
    %c0_i32_1 = arith.constant 0 : i32
    %c16_i32_2 = arith.constant 16 : i32
    %6 = arith.muli %c0_i32_1, %c16_i32_2 : i32
    %7 = tpu.assume_multiple %6, 16 : i32
    %8 = arith.index_cast %7 : i32 to index
    %c0 = arith.constant 0 : index
    %9 = vector.load %arg1[%8, %c0] : memref<16x128xf32, #tpu.memory_space<vmem>>, vector<16x128xf32>
    %10 = arith.index_cast %7 : i32 to index
    %c0_3 = arith.constant 0 : index
    %11 = vector.load %arg2[%10, %c0_3] : memref<16x128xf32, #tpu.memory_space<vmem>>, vector<16x128xf32>
    %12 = arith.index_cast %7 : i32 to index
    %c0_4 = arith.constant 0 : index
    %13 = vector.load %arg3[%12, %c0_4] : memref<16x128xf32, #tpu.memory_space<vmem>>, vector<16x128xf32>
    %14 = arith.subf %9, %13 : vector<16x128xf32>
    %15 = arith.subf %11, %14 : vector<16x128xf32>
    %16 = arith.addf %9, %13 : vector<16x128xf32>
    %17 = arith.subf %11, %16 : vector<16x128xf32>
    %cst_5 = arith.constant 1.000000e-01 : f32
    %18 = vector.broadcast %cst_5 : f32 to vector<16x128xf32>
    %19 = arith.mulf %18, %15 : vector<16x128xf32>
    %cst_6 = arith.constant -0.899999976 : f32
    %20 = vector.broadcast %cst_6 : f32 to vector<16x128xf32>
    %21 = arith.mulf %20, %15 : vector<16x128xf32>
    %22 = arith.maximumf %19, %21 : vector<16x128xf32>
    %cst_7 = arith.constant 0.899999976 : f32
    %23 = vector.broadcast %cst_7 : f32 to vector<16x128xf32>
    %24 = arith.mulf %23, %17 : vector<16x128xf32>
    %cst_8 = arith.constant -1.000000e-01 : f32
    %25 = vector.broadcast %cst_8 : f32 to vector<16x128xf32>
    %26 = arith.mulf %25, %17 : vector<16x128xf32>
    %27 = arith.maximumf %24, %26 : vector<16x128xf32>
    %28 = arith.addf %22, %27 : vector<16x128xf32>
    %c16_i32_9 = arith.constant 16 : i32
    %29 = arith.muli %c0_i32_1, %c16_i32_9 : i32
    %30 = arith.addi %3, %29 : i32
    %31 = vector.broadcast %30 : i32 to vector<16x128xi32>
    %32 = arith.addi %31, %4 : vector<16x128xi32>
    %c16_i32_10 = arith.constant 16 : i32
    %33 = vector.broadcast %c16_i32_10 : i32 to vector<16x128xi32>
    %34 = arith.cmpi slt, %32, %33 : vector<16x128xi32>
    %cst_11 = arith.constant 0.000000e+00 : f32
    %35 = vector.broadcast %cst_11 : f32 to vector<16x128xf32>
    %36 = arith.select %34, %28, %35 : vector<16x128xi1>, vector<16x128xf32>
    %37 = vector.shape_cast %36 : vector<16x128xf32> to vector<2x8x128xf32>
    %cst_12 = arith.constant dense<0.000000e+00> : vector<8x128xf32>
    %38 = vector.multi_reduction <add>, %37, %cst_12 [0] : vector<2x8x128xf32> to vector<8x128xf32>
    %39 = arith.addf %5, %38 : vector<8x128xf32>
    %c1_i32 = arith.constant 1 : i32
    %c0_13 = arith.constant 0 : index
    %c0_14 = arith.constant 0 : index
    %40 = vector.load %arg4[%c0_13, %c0_14] : memref<8x128xf32, #tpu.memory_space<vmem>>, vector<8x128xf32>
    %41 = arith.addf %40, %39 : vector<8x128xf32>
    %c0_15 = arith.constant 0 : index
    %c0_16 = arith.constant 0 : index
    %42 = vector.load %arg4[%c0_15, %c0_16] : memref<8x128xf32, #tpu.memory_space<vmem>>, vector<8x128xf32>
    tpu.vector_store %arg4[%c0_15, %c0_16], %41 {strides = array<i32>} : memref<8x128xf32, #tpu.memory_space<vmem>>, vector<8x128xf32>,
    return
  }
  func.func @transform_0(%arg0: i32) -> (i32, i32) {
    %c0_i32 = arith.constant 0 : i32
    %c0_i32_0 = arith.constant 0 : i32
    return %arg0, %c0_i32 : i32, i32
  }
  func.func @transform_1(%arg0: i32) -> (i32, i32) {
    %c0_i32 = arith.constant 0 : i32
    %c0_i32_0 = arith.constant 0 : i32
    return %arg0, %c0_i32 : i32, i32
  }
  func.func @transform_2(%arg0: i32) -> (i32, i32) {
    %c0_i32 = arith.constant 0 : i32
    %c0_i32_0 = arith.constant 0 : i32
    return %arg0, %c0_i32 : i32, i32
  }
  func.func @transform_3(%arg0: i32) -> (i32, i32) {
    %c0_i32 = arith.constant 0 : i32
    %c0_i32_0 = arith.constant 0 : i32
    %c0_i32_1 = arith.constant 0 : i32
    return %c0_i32, %c0_i32_0 : i32, i32
  }
}

</mosaic_0001>

<llo_original>
// kernel: tpu_custom_call.1
$region0: #{tpu_custom_call.1}
  #allocation0 [shape = 'u32[]', space=smem, size = 0x4, offset = 0x4, fixed_abs, tag = 'smem constant byte address 0x4 - core index']
  #allocation1 [shape = 'u32[144,128]{1,0:T(1,128)}', space=vmem, size = 0x12000, scoped, tag = 'internal scratch']
  %s0 = inlined_call_operand.hbm [shape: f32[16,128], index: 0, kind: input, shape index: {}]
  %s1 = inlined_call_operand.hbm [shape: f32[16,128], index: 1, kind: input, shape index: {}]
  %s2 = inlined_call_operand.hbm [shape: f32[16,128], index: 2, kind: input, shape index: {}]
  %s3 = inlined_call_operand.hbm [shape: f32[8,128], index: 3, kind: output, shape index: {}]
  %s4 = sld [smem:[#allocation0]]
  $region38: #{tpu_custom_call.1} parent=0
    _
  %s6 = ssub.s32 1, %s4
  %s7 = scalar_select 0, %s6, %s4
  $region1: #{tpu_custom_call.1} parent=0
    #allocation2 [shape = 'u8[8192]{0}', space=vmem, size = 0x2000, scoped, tag = 'input window, operand 0, single buffered']
    #allocation3 [shape = 's32[1]{0}', space=sflag, size = 0x4, scoped, tag = 'scoped memory for tpu_custom_call.1']
    #allocation4 [shape = 's32[1]{0}', space=sflag, size = 0x4, scoped, tag = 'scoped memory for tpu_custom_call.1']
    #allocation5 [shape = 'u8[8192]{0}', space=vmem, size = 0x2000, scoped, tag = 'input window, operand 1, single buffered']
    #allocation6 [shape = 's32[1]{0}', space=sflag, size = 0x4, scoped, tag = 'scoped memory for tpu_custom_call.1']
    #allocation7 [shape = 'u8[8192]{0}', space=vmem, size = 0x2000, scoped, tag = 'input window, operand 2, single buffered']
    #allocation8 [shape = 'u8[4096]{0}', space=vmem, size = 0x1000, scoped, tag = 'output window, operand 0, single buffered']
    %8 = vsyncpa [#allocation3], 0
    %9 = vsyncpa [#allocation6], 0
    %10 = vsyncpa [#allocation4], 0
    // Predicated region
    $region2: #{tpu_custom_call.1} parent=1 // pred_check
      _
    $region3: #{tpu_custom_call.1} parent=1 // pred_check_branch
      %12 = sbr.rel (0) target = $region5
    $region4: #{tpu_custom_call.1} parent=1 // pred_region
      %s14 = ssub.s32 256, 256
      %15 = vsyncadd [#allocation3], %s14
      %s16 = sshll.u32 [#allocation2], 4
      %s17 = int_to_ptr.vmem [resolvable:$true] %s16
      %22 = dma.hbm_to_vmem [thread:$0]  %s0, 256, %s17, [#allocation3], 128, 128, 8
    $region5: #{tpu_custom_call.1} parent=1 // pred_fallthru
      _
    // Predicated region
    $region6: #{tpu_custom_call.1} parent=1 // pred_check
      _
    $region7: #{tpu_custom_call.1} parent=1 // pred_check_branch
      %24 = sbr.rel (0) target = $region9
    $region8: #{tpu_custom_call.1} parent=1 // pred_region
      %s26 = ssub.s32 256, 256
      %27 = vsyncadd [#allocation6], %s26
      %s28 = sshll.u32 [#allocation5], 4
      %s29 = int_to_ptr.vmem [resolvable:$true] %s28
      %34 = dma.hbm_to_vmem [thread:$0]  %s1, 256, %s29, [#allocation6], 128, 128, 8
    $region9: #{tpu_custom_call.1} parent=1 // pred_fallthru
      _
    // Predicated region
    $region10: #{tpu_custom_call.1} parent=1 // pred_check
      _
    $region11: #{tpu_custom_call.1} parent=1 // pred_check_branch
      %36 = sbr.rel (0) target = $region13
    $region12: #{tpu_custom_call.1} parent=1 // pred_region
      %s38 = ssub.s32 256, 256
      %39 = vsyncadd [#allocation6], %s38
      %s40 = sshll.u32 [#allocation7], 4
      %s41 = int_to_ptr.vmem [resolvable:$true] %s40
      %46 = dma.hbm_to_vmem [thread:$0]  %s2, 256, %s41, [#allocation6], 128, 128, 8
    $region13: #{tpu_custom_call.1} parent=1 // pred_fallthru
      _
    // Predicated region
    $region14: #{tpu_custom_call.1} parent=1 // pred_check
      _
    $region15: #{tpu_custom_call.1} parent=1 // pred_check_branch
      %48 = sbr.rel (0) target = $region17
    $region16: #{tpu_custom_call.1} parent=1 // pred_region
      %49 = dma.done [#allocation3], 256
    $region17: #{tpu_custom_call.1} parent=1 // pred_fallthru
      _
    // Predicated region
    $region18: #{tpu_custom_call.1} parent=1 // pred_check
      _
    $region19: #{tpu_custom_call.1} parent=1 // pred_check_branch
      %51 = sbr.rel (0) target = $region21
    $region20: #{tpu_custom_call.1} parent=1 // pred_region
      %52 = dma.done [#allocation6], 256
    $region21: #{tpu_custom_call.1} parent=1 // pred_fallthru
      _
    // Predicated region
    $region22: #{tpu_custom_call.1} parent=1 // pred_check
      _
    $region23: #{tpu_custom_call.1} parent=1 // pred_check_branch
      %54 = sbr.rel (0) target = $region25
    $region24: #{tpu_custom_call.1} parent=1 // pred_region
      %55 = dma.done [#allocation6], 256
    $region25: #{tpu_custom_call.1} parent=1 // pred_fallthru
      _
    %p56 = scmp.eq.s32.totalorder 0, 0
    // Predicated region
    $region26: #{tpu_custom_call.1} parent=1 // pred_check
      %p57 = pneg %p56
    $region27: #{tpu_custom_call.1} parent=1 // pred_check_branch
      %59 = sbr.rel (%p57) target = $region29
    $region28: #{tpu_custom_call.1} parent=1 // pred_region
      %60 = vst [vmem:[#allocation8] sm:$0xff] 0.0
    $region29: #{tpu_custom_call.1} parent=1 // pred_fallthru
      _
    %s61 = smul.u32 0, 16
    %v62 = vlaneseq
    %v63 = vshrl.u32 %v62, 7
    %v64 = vadd.s32 %v63, 8
    %v65 = vld [vmem:[#allocation2] sm:$0xff]
    %v66 = vld [vmem:[#allocation2 + $0x8] sm:$0xff]
    %v67 = vld [vmem:[#allocation5] sm:$0xff]
    %v68 = vld [vmem:[#allocation5 + $0x8] sm:$0xff]
    %v69 = vld [vmem:[#allocation7] sm:$0xff]
    %v70 = vld [vmem:[#allocation7 + $0x8] sm:$0xff]
    %v71 = vsub.f32 %v65, %v69
    %v72 = vsub.f32 %v66, %v70
    %v73 = vsub.f32 %v67, %v71
    %v74 = vsub.f32 %v68, %v72
    %v75 = vadd.f32 %v65, %v69
    %v76 = vadd.f32 %v66, %v70
    %v77 = vsub.f32 %v67, %v75
    %v78 = vsub.f32 %v68, %v76
    %v79 = vmul.f32 %v73, 0.1
    %v80 = vmul.f32 %v74, 0.1
    %v81 = vmul.f32 %v73, -0.9
    %v82 = vmul.f32 %v74, -0.9
    %v83 = vmax.f32 %v79, %v81
    %v84 = vmax.f32 %v80, %v82
    %v85 = vmul.f32 %v77, 0.9
    %v86 = vmul.f32 %v78, 0.9
    %v87 = vmul.f32 %v77, -0.1
    %v88 = vmul.f32 %v78, -0.1
    %v89 = vmax.f32 %v85, %v87
    %v90 = vmax.f32 %v86, %v88
    %v91 = vadd.f32 %v83, %v89
    %v92 = vadd.f32 %v84, %v90
    %v93 = vstv %s61
    %v94 = vadd.s32 %v93, %v63
    %v95 = vadd.s32 %v93, %v64
    %vm96 = vcmp.lt.s32.totalorder %v94, 16
    %vm97 = vcmp.lt.s32.totalorder %v95, 16
    %v98 = vsel %vm96, %v91, 0.0
    %v99 = vsel %vm97, %v92, 0.0
    %v100 = vadd.f32 %v98, %v99
    %v101 = vadd.f32 %v100, 0.0
    %v102 = vld [vmem:[#allocation8] sm:$0xff]
    %v103 = vadd.f32 %v102, %v101
    %104 = vst [vmem:[#allocation8] sm:$0xff] %v103
    // Predicated region
    $region30: #{tpu_custom_call.1} parent=1 // pred_check
      _
    $region31: #{tpu_custom_call.1} parent=1 // pred_check_branch
      %106 = sbr.rel (0) target = $region33
    $region32: #{tpu_custom_call.1} parent=1 // pred_region
      %s108 = ssub.s32 128, 128
      %109 = vsyncadd [#allocation4], %s108
      %s111 = sshll.u32 [#allocation8], 4
      %s112 = int_to_ptr.vmem [resolvable:$true] %s111
      %114 = dma.vmem_to_hbm [thread:$0]  %s112, 128, %s3, [#allocation4]
    $region33: #{tpu_custom_call.1} parent=1 // pred_fallthru
      _
    // Predicated region
    $region34: #{tpu_custom_call.1} parent=1 // pred_check
      _
    $region35: #{tpu_custom_call.1} parent=1 // pred_check_branch
      %116 = sbr.rel (0) target = $region37
    $region36: #{tpu_custom_call.1} parent=1 // pred_region
      %117 = dma.done [#allocation4], 128
    $region37: #{tpu_custom_call.1} parent=1 // pred_fallthru
      _
    %118 = vsyncpa [#allocation3], 1
    %119 = vsyncpa [#allocation6], 1
    %120 = vsyncpa [#allocation4], 1

</llo_original>
